<compile_context>
chip_gen: v5e
topology: v5e:2x2
jax: 0.10.0
libtpu: 0.0.40
codegen_flags: <defaults>
</compile_context>

<pallas_src>
import math
from math import gcd

import jax
import jax.numpy as jnp
from jax.experimental import pallas as pl
from jax.experimental.pallas import tpu as pltpu


def _learned_random_kernel(mu_ref, sigma_ref, noise_ref, out_ref):
    # mu_ref / sigma_ref: (1, L) learned params, broadcast over sublanes.
    # noise_ref:          (block_rows, L) standard-normal draws.
    # out_ref:            (block_rows, L) output block.
    mu = mu_ref[...]         # read once per block; no inner loop -> no re-broadcast
    sigma = sigma_ref[...]
    out_ref[...] = (mu + sigma * noise_ref[...]).astype(out_ref.dtype)


def learned_random_forward(mu, sigma, batch_size, num_slots, seed,
                           *, out_dtype=jnp.float32,
                           block_bytes=4 * 1024 * 1024):
    """mu, sigma: (1, 1, D) float32 params. Returns (batch_size, num_slots, D)."""
    D = mu.shape[-1]
    N = batch_size * num_slots            # number of slot rows
    mu_flat = mu.reshape(D).astype(jnp.float32)
    sigma_flat = sigma.reshape(D).astype(jnp.float32)

    # ---- lane-dense 2-D layout (R rows, L lanes), R * L == N * D ----
    L = (D * 128) // gcd(D, 128)          # lcm(D, 128): full, unmasked lanes
    reps = L // D                         # slots packed per row
    if N % reps == 0:
        R = N // reps
        mu_row = jnp.tile(mu_flat, (reps,)).reshape(1, L)
        sigma_row = jnp.tile(sigma_flat, (reps,)).reshape(1, L)
    else:
        # TODO(synk): lane-sparse fallback (masked stores) when N*D is not a
        # multiple of lcm(D, 128).
        L, R = D, N
        mu_row = mu_flat.reshape(1, L)
        sigma_row = sigma_flat.reshape(1, L)

    # ---- block sizing: big sublane-aligned blocks, but always >= 2 blocks when
    #      R is non-trivial so both v7x TensorCores get work ----
    target_rows = max(8, block_bytes // (L * 4))
    target_rows -= target_rows % 8
    if R < 16:
        block_rows = R                    # single block == full array dims (always legal)
        grid = (1,)
    else:
        half = ((pl.cdiv(R, 2) + 7) // 8) * 8   # round_up(cdiv(R, 2), 8)
        block_rows = max(8, min(target_rows, half))
        grid = (pl.cdiv(R, block_rows),)

    # ---- noise: deterministic per seed, generated in the packed (R, L) layout ----
    noise = jax.random.normal(jax.random.PRNGKey(seed), (R, L), dtype=jnp.float32)

    total = N * D
    out_itemsize = jnp.dtype(out_dtype).itemsize

    out2d = pl.pallas_call(
        _learned_random_kernel,
        out_shape=jax.ShapeDtypeStruct((R, L), out_dtype),
        grid_spec=pltpu.PrefetchScalarGridSpec(
            num_scalar_prefetch=0,
            grid=grid,
            in_specs=[
                pl.BlockSpec((1, L), lambda i: (0, 0)),            # mu (shared)
                pl.BlockSpec((1, L), lambda i: (0, 0)),            # sigma (shared)
                pl.BlockSpec((block_rows, L), lambda i: (i, 0)),   # noise block
            ],
            out_specs=pl.BlockSpec((block_rows, L), lambda i: (i, 0)),
        ),
        compiler_params=pltpu.CompilerParams(
            dimension_semantics=("parallel",),
        ),
        cost_estimate=pl.CostEstimate(
            flops=2 * total,                                        # one FMA / element
            transcendentals=0,
            bytes_accessed=total * 4 + total * out_itemsize + 2 * L * 4,
        ),
    )(mu_row, sigma_row, noise)

    # Pure row-major reshape back to the PyTorch layout.
    return out2d.reshape(batch_size, num_slots, D)


class LearnedRandom:
    """JAX/Pallas port of the PyTorch LearnedRandom slot initializer."""

    def __init__(self, num_slots: int, slot_dim: int, key) -> None:
        self.num_slots = num_slots
        self.slot_dim = slot_dim
        limit = math.sqrt(6.0 / (1 + slot_dim))
        k_mu, k_sigma = jax.random.split(key)
        # Mirrors torch.nn.init.uniform_(-limit, limit) on the randn-init params.
        self.slots_mu = jax.random.uniform(
            k_mu, (1, 1, slot_dim), minval=-limit, maxval=limit, dtype=jnp.float32
        )
        self.slots_sigma = jax.random.uniform(
            k_sigma, (1, 1, slot_dim), minval=-limit, maxval=limit, dtype=jnp.float32
        )

    def __call__(self, batch_size: int, seed: int) -> jnp.ndarray:
        return learned_random_forward(
            self.slots_mu, self.slots_sigma, batch_size, self.num_slots, seed
        )


if __name__ == "__main__":
    key = jax.random.PRNGKey(0)

    batch_size = 2
    num_slots = 8
    slot_dim = 32

    module = LearnedRandom(num_slots=num_slots, slot_dim=slot_dim, key=key)

    slots = jax.block_until_ready(module(batch_size, seed=0))
    assert slots.shape == (batch_size, num_slots, slot_dim)
    assert slots.dtype == jnp.float32
    assert bool(jnp.all(jnp.isfinite(slots)))

    # Determinism: same seed -> identical draws; different seed -> different draws.
    slots_same = jax.block_until_ready(module(batch_size, seed=0))
    assert bool(jnp.array_equal(slots, slots_same))
    slots_diff = jax.block_until_ready(module(batch_size, seed=1))
    assert not bool(jnp.array_equal(slots, slots_diff))

    # Exact reference check: slots must equal mu + sigma * noise for the same key
    # (noise is jax.random.normal in the packed (R, L) layout; reshape matches
    # the row-major (B, S, D) layout because consecutive slots share a row).
    N = batch_size * num_slots
    reps = 128 // slot_dim
    R, L = N // reps, 128
    noise_ref = jax.random.normal(jax.random.PRNGKey(0), (R, L), dtype=jnp.float32)
    noise_ref = noise_ref.reshape(batch_size, num_slots, slot_dim)
    expected = module.slots_mu + module.slots_sigma * noise_ref
    assert float(jnp.max(jnp.abs(slots - expected))) < 1e-6

    # Distributional sanity + multi-block grid path (R=512 -> grid=(2,)).
    big_batch = 256
    big = jax.block_until_ready(module(big_batch, seed=123))
    samples = big.reshape(big_batch * num_slots, slot_dim)
    emp_mean = samples.mean(axis=0)
    emp_std = samples.std(axis=0)
    mu_ref = module.slots_mu.reshape(slot_dim)
    sigma_ref = jnp.abs(module.slots_sigma.reshape(slot_dim))
    assert float(jnp.max(jnp.abs(emp_mean - mu_ref))) < 0.15
    assert float(jnp.max(jnp.abs(emp_std - sigma_ref))) < 0.15

    print("KERNEL_OK")
</pallas_src>

<mosaic_0001>
module attributes {stable_mosaic.version = 11 : i64} {
  func.func @_learned_random_kernel(%arg0: i32, %arg1: memref<1x128xf32, #tpu.memory_space<vmem>>, %arg2: memref<1x128xf32, #tpu.memory_space<vmem>>, %arg3: memref<4x128xf32, #tpu.memory_space<vmem>>, %arg4: memref<4x128xf32, #tpu.memory_space<vmem>>) attributes {dimension_semantics = [#tpu.dimension_semantics<parallel>], iteration_bounds = array<i64: 1>, scalar_prefetch = 0 : i64, scratch_operands = 0 : i64, tpu.core_type = #tpu.core_type<tc>, window_params = [{pipeline_mode = #tpu.pipeline_mode<synchronous>, transform_indices = @transform_0, window_bounds = array<i64: 1, 128>}, {pipeline_mode = #tpu.pipeline_mode<synchronous>, transform_indices = @transform_1, window_bounds = array<i64: 1, 128>}, {transform_indices = @transform_2, window_bounds = array<i64: 4, 128>}, {transform_indices = @transform_3, window_bounds = array<i64: 4, 128>}]} {
    %c0 = arith.constant 0 : index
    %c0_0 = arith.constant 0 : index
    %0 = vector.load %arg1[%c0, %c0_0] : memref<1x128xf32, #tpu.memory_space<vmem>>, vector<1x128xf32>
    %c0_1 = arith.constant 0 : index
    %c0_2 = arith.constant 0 : index
    %1 = vector.load %arg2[%c0_1, %c0_2] : memref<1x128xf32, #tpu.memory_space<vmem>>, vector<1x128xf32>
    %c0_3 = arith.constant 0 : index
    %c0_4 = arith.constant 0 : index
    %2 = vector.load %arg3[%c0_3, %c0_4] : memref<4x128xf32, #tpu.memory_space<vmem>>, vector<4x128xf32>
    %3 = vector.broadcast %1 : vector<1x128xf32> to vector<4x128xf32>
    %4 = arith.mulf %3, %2 : vector<4x128xf32>
    %5 = vector.broadcast %0 : vector<1x128xf32> to vector<4x128xf32>
    %6 = arith.addf %5, %4 : vector<4x128xf32>
    %c0_5 = arith.constant 0 : index
    %c0_6 = arith.constant 0 : index
    %7 = vector.load %arg4[%c0_5, %c0_6] : memref<4x128xf32, #tpu.memory_space<vmem>>, vector<4x128xf32>
    tpu.vector_store %arg4[%c0_5, %c0_6], %6 {strides = array<i32>} : memref<4x128xf32, #tpu.memory_space<vmem>>, vector<4x128xf32>,
    return
  }
  func.func @transform_0(%arg0: i32) -> (i32, i32) {
    %c0_i32 = arith.constant 0 : i32
    %c0_i32_0 = arith.constant 0 : i32
    %c0_i32_1 = arith.constant 0 : i32
    return %c0_i32, %c0_i32_0 : i32, i32
  }
  func.func @transform_1(%arg0: i32) -> (i32, i32) {
    %c0_i32 = arith.constant 0 : i32
    %c0_i32_0 = arith.constant 0 : i32
    %c0_i32_1 = arith.constant 0 : i32
    return %c0_i32, %c0_i32_0 : i32, i32
  }
  func.func @transform_2(%arg0: i32) -> (i32, i32) {
    %c0_i32 = arith.constant 0 : i32
    %c0_i32_0 = arith.constant 0 : i32
    return %arg0, %c0_i32 : i32, i32
  }
  func.func @transform_3(%arg0: i32) -> (i32, i32) {
    %c0_i32 = arith.constant 0 : i32
    %c0_i32_0 = arith.constant 0 : i32
    return %arg0, %c0_i32 : i32, i32
  }
}

</mosaic_0001>

<llo_original>
// kernel: tpu_custom_call.1
$region0: #{tpu_custom_call.1}
  #allocation0 [shape = 'u32[]', space=smem, size = 0x4, offset = 0x4, fixed_abs, tag = 'smem constant byte address 0x4 - core index']
  #allocation1 [shape = 'u32[72,128]{1,0:T(1,128)}', space=vmem, size = 0x9000, scoped, tag = 'internal scratch']
  %s0 = inlined_call_operand.hbm [shape: f32[1,128], index: 0, kind: input, shape index: {}]
  %s1 = inlined_call_operand.hbm [shape: f32[1,128], index: 1, kind: input, shape index: {}]
  %s2 = inlined_call_operand.hbm [shape: f32[4,128], index: 2, kind: input, shape index: {}]
  %s3 = inlined_call_operand.hbm [shape: f32[4,128], index: 3, kind: output, shape index: {}]
  %s4 = sld [smem:[#allocation0]]
  $region34: #{tpu_custom_call.1} parent=0
    _
  %s6 = ssub.s32 1, %s4
  %s7 = scalar_select 0, %s6, %s4
  $region1: #{tpu_custom_call.1} parent=0
    #allocation2 [shape = 'u8[512]{0}', space=vmem, size = 0x400, scoped, tag = 'input window, operand 0, single buffered']
    #allocation3 [shape = 's32[1]{0}', space=sflag, size = 0x4, scoped, tag = 'scoped memory for tpu_custom_call.1']
    #allocation4 [shape = 's32[1]{0}', space=sflag, size = 0x4, scoped, tag = 'scoped memory for tpu_custom_call.1']
    #allocation5 [shape = 'u8[512]{0}', space=vmem, size = 0x400, scoped, tag = 'input window, operand 1, single buffered']
    #allocation6 [shape = 's32[1]{0}', space=sflag, size = 0x4, scoped, tag = 'scoped memory for tpu_custom_call.1']
    #allocation7 [shape = 'u8[2048]{0}', space=vmem, size = 0x800, scoped, tag = 'input window, operand 2, single buffered']
    #allocation8 [shape = 'u8[2048]{0}', space=vmem, size = 0x800, scoped, tag = 'output window, operand 0, single buffered']
    %8 = vsyncpa [#allocation3], 0
    %9 = vsyncpa [#allocation6], 0
    %10 = vsyncpa [#allocation4], 0
    // Predicated region
    $region2: #{tpu_custom_call.1} parent=1 // pred_check
      _
    $region3: #{tpu_custom_call.1} parent=1 // pred_check_branch
      %12 = sbr.rel (0) target = $region5
    $region4: #{tpu_custom_call.1} parent=1 // pred_region
      %14 = vsyncadd [#allocation3], 0
      %s16 = sshll.u32 %s0, 4
      %s17 = int_to_ptr.hbm [resolvable:$true] %s16
      %s18 = sshll.u32 [#allocation2], 4
      %s19 = int_to_ptr.vmem [resolvable:$true] %s18
      %21 = dma.hbm_to_vmem [thread:$0]  %s17, 16, %s19, [#allocation3]
    $region5: #{tpu_custom_call.1} parent=1 // pred_fallthru
      _
    // Predicated region
    $region6: #{tpu_custom_call.1} parent=1 // pred_check
      _
    $region7: #{tpu_custom_call.1} parent=1 // pred_check_branch
      %23 = sbr.rel (0) target = $region9
    $region8: #{tpu_custom_call.1} parent=1 // pred_region
      %25 = vsyncadd [#allocation6], 0
      %s27 = sshll.u32 %s1, 4
      %s28 = int_to_ptr.hbm [resolvable:$true] %s27
      %s29 = sshll.u32 [#allocation5], 4
      %s30 = int_to_ptr.vmem [resolvable:$true] %s29
      %32 = dma.hbm_to_vmem [thread:$0]  %s28, 16, %s30, [#allocation6]
    $region9: #{tpu_custom_call.1} parent=1 // pred_fallthru
      _
    // Predicated region
    $region10: #{tpu_custom_call.1} parent=1 // pred_check
      _
    $region11: #{tpu_custom_call.1} parent=1 // pred_check_branch
      %34 = sbr.rel (0) target = $region13
    $region12: #{tpu_custom_call.1} parent=1 // pred_region
      %36 = vsyncadd [#allocation6], 0
      %s38 = sshll.u32 %s2, 4
      %s39 = int_to_ptr.hbm [resolvable:$true] %s38
      %s40 = sshll.u32 [#allocation7], 4
      %s41 = int_to_ptr.vmem [resolvable:$true] %s40
      %43 = dma.hbm_to_vmem [thread:$0]  %s39, 64, %s41, [#allocation6]
    $region13: #{tpu_custom_call.1} parent=1 // pred_fallthru
      _
    // Predicated region
    $region14: #{tpu_custom_call.1} parent=1 // pred_check
      _
    $region15: #{tpu_custom_call.1} parent=1 // pred_check_branch
      %45 = sbr.rel (0) target = $region17
    $region16: #{tpu_custom_call.1} parent=1 // pred_region
      %47 = dma.done [#allocation3], 16
    $region17: #{tpu_custom_call.1} parent=1 // pred_fallthru
      _
    // Predicated region
    $region18: #{tpu_custom_call.1} parent=1 // pred_check
      _
    $region19: #{tpu_custom_call.1} parent=1 // pred_check_branch
      %49 = sbr.rel (0) target = $region21
    $region20: #{tpu_custom_call.1} parent=1 // pred_region
      %51 = dma.done [#allocation6], 16
    $region21: #{tpu_custom_call.1} parent=1 // pred_fallthru
      _
    // Predicated region
    $region22: #{tpu_custom_call.1} parent=1 // pred_check
      _
    $region23: #{tpu_custom_call.1} parent=1 // pred_check_branch
      %53 = sbr.rel (0) target = $region25
    $region24: #{tpu_custom_call.1} parent=1 // pred_region
      %55 = dma.done [#allocation6], 64
    $region25: #{tpu_custom_call.1} parent=1 // pred_fallthru
      _
    %v56 = vld [vmem:[#allocation2] sm:$0x1]
    %v57 = vld [vmem:[#allocation5] sm:$0x1]
    %v58 = vld [vmem:[#allocation7] sm:$0xf]
    %v60 = vperm.slane %v57, 0
    %v62 = vmul.f32 %v60, %v58
    %v64 = vperm.slane %v56, 0
    %v66 = vadd.f32 %v64, %v62
    %67 = vst [vmem:[#allocation8] sm:$0xf] %v66
    // Predicated region
    $region26: #{tpu_custom_call.1} parent=1 // pred_check
      _
    $region27: #{tpu_custom_call.1} parent=1 // pred_check_branch
      %69 = sbr.rel (0) target = $region29
    $region28: #{tpu_custom_call.1} parent=1 // pred_region
      %71 = vsyncadd [#allocation4], 0
      %s73 = sshll.u32 [#allocation8], 4
      %s74 = int_to_ptr.vmem [resolvable:$true] %s73
      %s75 = sshll.u32 %s3, 4
      %s76 = int_to_ptr.hbm [resolvable:$true] %s75
      %78 = dma.vmem_to_hbm [thread:$0]  %s74, 64, %s76, [#allocation4]
    $region29: #{tpu_custom_call.1} parent=1 // pred_fallthru
      _
    // Predicated region
    $region30: #{tpu_custom_call.1} parent=1 // pred_check
      _
    $region31: #{tpu_custom_call.1} parent=1 // pred_check_branch
      %80 = sbr.rel (0) target = $region33
    $region32: #{tpu_custom_call.1} parent=1 // pred_region
      %82 = dma.done [#allocation4], 64
    $region33: #{tpu_custom_call.1} parent=1 // pred_fallthru
      _
    %83 = vsyncpa [#allocation3], 1
    %84 = vsyncpa [#allocation6], 1
    %85 = vsyncpa [#allocation4], 1

</llo_original>
